<compile_context>
chip_gen: v7x
topology: tpu7x:2x2x1
jax: 0.10.0
libtpu: 0.0.40
codegen_flags: <defaults>
</compile_context>

<pallas_src>
import functools

import jax
import jax.numpy as jnp
from jax import lax
from jax.experimental import pallas as pl
from jax.experimental.pallas import tpu as pltpu

_LANE = 128
# Per-buffer VMEM byte budget for spatial tiles of the streaming (two-pass)
# path.  ~4-5 buffers of this size are live at once (double-buffered in/out +
# f32 accumulator), so 1 MiB stays well inside v5e's 16 MiB scoped default
# while still giving multi-KLane tiles at small channel counts.
_DEFAULT_TILE_BUDGET = 1 << 20
# Per-sample f32 byte threshold below which the single-pass fused kernel is
# used (x read once, out written once).  2 MiB -> <= ~10 MiB live VMEM worst
# case, safe on every generation's default scoped VMEM.
_DEFAULT_FUSED_BUDGET = 2 << 20


def _round_up(v, m):
    return ((v + m - 1) // m) * m


def _pick_tile(c, hw, itemsize, budget_bytes):
    """Largest multiple-of-128 lane tile whose (C, thw) slab fits the budget."""
    lanes = (budget_bytes // max(c * itemsize, 1)) // _LANE * _LANE
    return int(max(_LANE, min(lanes, _round_up(hw, _LANE))))


def _sigmoid(z):
    # exp goes to the EUP; keeps lowering trivially portable across v5e/v6e/v7x.
    return 1.0 / (1.0 + jnp.exp(-z))


def _excite(pooled, w1t_ref, b1_ref, w2_ref, b2_ref):
    """Excitation from per-channel means, transpose-free.

    pooled: (C, 1) f32.  w1t: (C, I), b1: (1, I), w2: (C, I), b2: (C, 1).
      z1 = sum_C (w1t * pooled)  -> (1, I)   (sublane reduce)
      z2 = sum_I (w2  * silu(z1))-> (C, 1)   (lane reduce)
    Returns scale (C, 1) f32 = sigmoid(z2).
    """
    z1 = jnp.sum(w1t_ref[...] * pooled, axis=0, keepdims=True) + b1_ref[...]
    h = z1 * _sigmoid(z1)                                   # SiLU
    z2 = jnp.sum(w2_ref[...] * h, axis=1, keepdims=True) + b2_ref[...]
    return _sigmoid(z2)


# --------------------------------------------------------------------------
# Fused single-pass kernel: one grid step per sample, full (C, HW) block.
# --------------------------------------------------------------------------
def _fused_kernel(x_ref, w1t_ref, b1_ref, w2_ref, b2_ref, o_ref):
    x = x_ref[0].astype(jnp.float32)                         # (C, HW)
    hw = x.shape[-1]
    pooled = jnp.sum(x, axis=-1, keepdims=True) * (1.0 / hw)  # (C, 1) true mean
    scale = _excite(pooled, w1t_ref, b1_ref, w2_ref, b2_ref)  # (C, 1) f32
    o_ref[0] = (x * scale).astype(o_ref.dtype)


# --------------------------------------------------------------------------
# Two-pass fallback, pass 1: squeeze + excitation, tiled over HW.
# --------------------------------------------------------------------------
def _squeeze_excite_kernel(x_ref, w1t_ref, b1_ref, w2_ref, b2_ref,
                           scale_ref, acc_ref, *, hw):
    j = pl.program_id(1)
    n_t = pl.num_programs(1)
    thw = x_ref.shape[-1]

    @pl.when(j == 0)
    def _init():
        acc_ref[...] = jnp.zeros_like(acc_ref)

    x = x_ref[0].astype(jnp.float32)                          # (C, thw)

    if hw % thw == 0:
        # Lane-dense VPU accumulation; no per-tile XLU reduce or narrow store.
        acc_ref[...] += x
    else:
        @pl.when(j < n_t - 1)
        def _acc_full():
            acc_ref[...] += x

        @pl.when(j == n_t - 1)
        def _acc_masked():
            # Last tile is ragged: its out-of-bounds lanes are undefined on
            # read, so zero them before accumulating.
            lane = lax.broadcasted_iota(jnp.int32, x.shape, 1)
            valid = lane < (hw - j * thw)
            acc_ref[...] += jnp.where(valid, x, 0.0)

    @pl.when(j == n_t - 1)
    def _finalize():
        # Single cross-lane reduce + tiny excitation, once per sample.
        pooled = jnp.sum(acc_ref[...], axis=-1, keepdims=True) * (1.0 / hw)
        scale = _excite(pooled, w1t_ref, b1_ref, w2_ref, b2_ref)
        scale_ref[0] = scale.astype(scale_ref.dtype)


# --------------------------------------------------------------------------
# Two-pass fallback, pass 2: broadcast multiply (no mask needed: OOB writes
# on the ragged last tile are dropped).
# --------------------------------------------------------------------------
def _scale_kernel(s_ref, x_ref, o_ref):
    o_ref[0] = (x_ref[0].astype(jnp.float32) * s_ref[0]).astype(o_ref.dtype)


def _param_specs(c, idim):
    # Small, grid-invariant parameter blocks (full arrays, constant index map).
    return [
        pl.BlockSpec((c, idim), lambda *_: (0, 0)),   # w1t (C, I)
        pl.BlockSpec((1, idim), lambda *_: (0, 0)),   # b1  (1, I)
        pl.BlockSpec((c, idim), lambda *_: (0, 0)),   # w2  (C, I)
        pl.BlockSpec((c, 1), lambda *_: (0, 0)),      # b2  (C, 1)
    ]


@functools.partial(jax.jit,
                   static_argnames=("tile_budget_bytes", "fused_budget_bytes"))
def squeeze_excitation(x_nchw, w1, b1, w2, b2, *,
                       tile_budget_bytes=_DEFAULT_TILE_BUDGET,
                       fused_budget_bytes=_DEFAULT_FUSED_BUDGET):
    """SqueezeExcitation forward.

    x_nchw: (N, C, H, W); w1: (I, C); b1: (I,); w2: (C, I); b2: (C,)
    (1x1 conv weights with the trailing 1x1 spatial dims squeezed away).
    """
    N, C, H, W = x_nchw.shape
    idim = w1.shape[0]
    HW = H * W

    x_flat = x_nchw.reshape(N, C, HW)

    # Excitation params in f32, laid out so both matvecs are pure
    # broadcast-multiply + reduce (no in-kernel transposes).
    w1t = w1.astype(jnp.float32).T               # (C, I)
    b1r = b1.astype(jnp.float32).reshape(1, idim)
    w2f = w2.astype(jnp.float32)                 # (C, I)
    b2c = b2.astype(jnp.float32).reshape(C, 1)

    itemsize = x_flat.dtype.itemsize
    sample_f32_bytes = C * HW * 4

    # ---- Fused single-pass path: read x once, write out once -------------
    if sample_f32_bytes <= fused_budget_bytes:
        out_flat = pl.pallas_call(
            _fused_kernel,
            out_shape=jax.ShapeDtypeStruct((N, C, HW), x_flat.dtype),
            grid_spec=pltpu.PrefetchScalarGridSpec(
                num_scalar_prefetch=0,
                grid=(N,),
                in_specs=[pl.BlockSpec((1, C, HW), lambda b: (b, 0, 0))]
                + _param_specs(C, idim),
                out_specs=pl.BlockSpec((1, C, HW), lambda b: (b, 0, 0)),
            ),
            compiler_params=pltpu.CompilerParams(
                dimension_semantics=("parallel",)),
        )(x_flat, w1t, b1r, w2f, b2c)
        return out_flat.reshape(N, C, H, W)

    # ---- Two-pass streaming path (oversized samples) ----------------------
    thw = _pick_tile(C, HW, itemsize, tile_budget_bytes)
    n_t = pl.cdiv(HW, thw)

    # Pass 1: squeeze + excitation fused; emits (N, C, 1) f32 gates directly.
    scale = pl.pallas_call(
        functools.partial(_squeeze_excite_kernel, hw=HW),
        out_shape=jax.ShapeDtypeStruct((N, C, 1), jnp.float32),
        grid_spec=pltpu.PrefetchScalarGridSpec(
            num_scalar_prefetch=0,
            grid=(N, n_t),
            in_specs=[pl.BlockSpec((1, C, thw), lambda b, j: (b, 0, j))]
            + _param_specs(C, idim),
            out_specs=pl.BlockSpec((1, C, 1), lambda b, j: (b, 0, 0)),
            scratch_shapes=[pltpu.VMEM((C, thw), jnp.float32)],
        ),
        compiler_params=pltpu.CompilerParams(
            dimension_semantics=("parallel", "arbitrary")),
    )(x_flat, w1t, b1r, w2f, b2c)

    # Pass 2: broadcast multiply, lane-dense tiles, fully parallel grid.
    out_flat = pl.pallas_call(
        _scale_kernel,
        out_shape=jax.ShapeDtypeStruct((N, C, HW), x_flat.dtype),
        grid_spec=pltpu.PrefetchScalarGridSpec(
            num_scalar_prefetch=0,
            grid=(N, n_t),
            in_specs=[
                pl.BlockSpec((1, C, 1), lambda b, j: (b, 0, 0)),     # gate
                pl.BlockSpec((1, C, thw), lambda b, j: (b, 0, j)),   # x tile
            ],
            out_specs=pl.BlockSpec((1, C, thw), lambda b, j: (b, 0, j)),
        ),
        compiler_params=pltpu.CompilerParams(
            dimension_semantics=("parallel", "parallel")),
    )(scale, x_flat)

    return out_flat.reshape(N, C, H, W)


def _reference(x, w1, b1, w2, b2):
    pooled = jnp.mean(x, axis=(2, 3))                                  # (N, C)
    z1 = pooled @ w1.T + b1                                            # (N, I)
    h = z1 * jax.nn.sigmoid(z1)
    z2 = h @ w2.T + b2                                                 # (N, C)
    s = jax.nn.sigmoid(z2)[:, :, None, None]
    return x * s


if __name__ == "__main__":
    key = jax.random.PRNGKey(0)
    kx, k1, k2, k3, k4 = jax.random.split(key, 5)

    # Shapes consistent with the module: batch=2, channels=4, 16x16 spatial,
    # intermediate (squeeze) dims = 2.
    N, C, H, W, I = 2, 4, 16, 16, 2
    x = jax.random.normal(kx, (N, C, H, W), dtype=jnp.float32)
    w1 = jax.random.normal(k1, (I, C), dtype=jnp.float32) * 0.5   # conv1 (I,C,1,1)
    b1 = jax.random.normal(k2, (I,), dtype=jnp.float32) * 0.1
    w2 = jax.random.normal(k3, (C, I), dtype=jnp.float32) * 0.5   # conv2 (C,I,1,1)
    b2 = jax.random.normal(k4, (C,), dtype=jnp.float32) * 0.1

    out = jax.block_until_ready(squeeze_excitation(x, w1, b1, w2, b2))
    ref = _reference(x, w1, b1, w2, b2)
    assert out.shape == (N, C, H, W)
    assert jnp.allclose(out, ref, atol=1e-5, rtol=1e-5), "fused path mismatch"

    # Ragged spatial size, C>=8, forced through the tiled two-pass path with a
    # small tile budget so multi-tile accumulation and the last-tile mask run
    # (HW=576 -> tiles of 256 lanes: 256, 256, 64 valid).
    N2, C2, H2, W2, I2 = 2, 8, 24, 24, 4
    x2 = jax.random.normal(kx, (N2, C2, H2, W2), dtype=jnp.float32)
    w1b = jax.random.normal(k1, (I2, C2), dtype=jnp.float32) * 0.3
    b1b = jax.random.normal(k2, (I2,), dtype=jnp.float32) * 0.1
    w2b = jax.random.normal(k3, (C2, I2), dtype=jnp.float32) * 0.3
    b2b = jax.random.normal(k4, (C2,), dtype=jnp.float32) * 0.1
    out2 = jax.block_until_ready(
        squeeze_excitation(x2, w1b, b1b, w2b, b2b,
                           tile_budget_bytes=C2 * 256 * 4,
                           fused_budget_bytes=0))
    ref2 = _reference(x2, w1b, b1b, w2b, b2b)
    assert jnp.allclose(out2, ref2, atol=1e-5, rtol=1e-5), "two-pass mismatch"

    # bf16 activations (gate stays f32; multiply in f32, cast at the store).
    x3 = x.astype(jnp.bfloat16)
    out3 = jax.block_until_ready(squeeze_excitation(x3, w1, b1, w2, b2))
    ref3 = _reference(x3.astype(jnp.float32), w1, b1, w2, b2)
    assert out3.dtype == jnp.bfloat16
    assert jnp.allclose(out3.astype(jnp.float32), ref3, atol=3e-2, rtol=3e-2), \
        "bf16 path mismatch"

    print("KERNEL_OK")
</pallas_src>

<mosaic_0001>
module attributes {stable_mosaic.version = 11 : i64} {
  func.func @_fused_kernel(%arg0: i32, %arg1: memref<1x4x256xf32, #tpu.memory_space<vmem>>, %arg2: memref<4x2xf32, #tpu.memory_space<vmem>>, %arg3: memref<1x2xf32, #tpu.memory_space<vmem>>, %arg4: memref<4x2xf32, #tpu.memory_space<vmem>>, %arg5: memref<4x1xf32, #tpu.memory_space<vmem>>, %arg6: memref<1x4x256xf32, #tpu.memory_space<vmem>>) attributes {dimension_semantics = [#tpu.dimension_semantics<parallel>], iteration_bounds = array<i64: 2>, scalar_prefetch = 0 : i64, scratch_operands = 0 : i64, tpu.core_type = #tpu.core_type<tc>, window_params = [{transform_indices = @transform_0, window_bounds = array<i64: 1, 4, 256>}, {pipeline_mode = #tpu.pipeline_mode<synchronous>, transform_indices = @transform_1, window_bounds = array<i64: 4, 2>}, {pipeline_mode = #tpu.pipeline_mode<synchronous>, transform_indices = @transform_2, window_bounds = array<i64: 1, 2>}, {pipeline_mode = #tpu.pipeline_mode<synchronous>, transform_indices = @transform_3, window_bounds = array<i64: 4, 2>}, {pipeline_mode = #tpu.pipeline_mode<synchronous>, transform_indices = @transform_4, window_bounds = array<i64: 4, 1>}, {transform_indices = @transform_5, window_bounds = array<i64: 1, 4, 256>}]} {
    %c0 = arith.constant 0 : index
    %c0_0 = arith.constant 0 : index
    %c0_1 = arith.constant 0 : index
    %0 = vector.load %arg1[%c0, %c0_0, %c0_1] : memref<1x4x256xf32, #tpu.memory_space<vmem>>, vector<1x4x256xf32>
    %1 = vector.shape_cast %0 : vector<1x4x256xf32> to vector<4x256xf32>
    %cst = arith.constant dense<0.000000e+00> : vector<4xf32>
    %2 = vector.multi_reduction <add>, %1, %cst [1] : vector<4x256xf32> to vector<4xf32>
    %3 = vector.shape_cast %2 : vector<4xf32> to vector<4x1xf32>
    %cst_2 = arith.constant 3.906250e-03 : f32
    %4 = vector.broadcast %cst_2 : f32 to vector<4x1xf32>
    %5 = arith.mulf %3, %4 : vector<4x1xf32>
    %c0_3 = arith.constant 0 : index
    %c0_4 = arith.constant 0 : index
    %6 = vector.load %arg2[%c0_3, %c0_4] : memref<4x2xf32, #tpu.memory_space<vmem>>, vector<4x2xf32>
    %7 = vector.broadcast %5 : vector<4x1xf32> to vector<4x2xf32>
    %8 = arith.mulf %6, %7 : vector<4x2xf32>
    %cst_5 = arith.constant dense<0.000000e+00> : vector<2xf32>
    %9 = vector.multi_reduction <add>, %8, %cst_5 [0] : vector<4x2xf32> to vector<2xf32>
    %10 = vector.shape_cast %9 : vector<2xf32> to vector<1x2xf32>
    %c0_6 = arith.constant 0 : index
    %c0_7 = arith.constant 0 : index
    %11 = vector.load %arg3[%c0_6, %c0_7] : memref<1x2xf32, #tpu.memory_space<vmem>>, vector<1x2xf32>
    %12 = arith.addf %10, %11 : vector<1x2xf32>
    %cst_8 = arith.constant 0.000000e+00 : f32
    %13 = vector.broadcast %cst_8 : f32 to vector<1x2xf32>
    %14 = arith.subf %13, %12 : vector<1x2xf32>
    %15 = math.exp %14 : vector<1x2xf32>
    %cst_9 = arith.constant 1.000000e+00 : f32
    %16 = vector.broadcast %cst_9 : f32 to vector<1x2xf32>
    %17 = arith.addf %16, %15 : vector<1x2xf32>
    %cst_10 = arith.constant 1.000000e+00 : f32
    %18 = vector.broadcast %cst_10 : f32 to vector<1x2xf32>
    %19 = arith.divf %18, %17 : vector<1x2xf32>
    %20 = arith.mulf %12, %19 : vector<1x2xf32>
    %c0_11 = arith.constant 0 : index
    %c0_12 = arith.constant 0 : index
    %21 = vector.load %arg4[%c0_11, %c0_12] : memref<4x2xf32, #tpu.memory_space<vmem>>, vector<4x2xf32>
    %22 = vector.broadcast %20 : vector<1x2xf32> to vector<4x2xf32>
    %23 = arith.mulf %21, %22 : vector<4x2xf32>
    %cst_13 = arith.constant dense<0.000000e+00> : vector<4xf32>
    %24 = vector.multi_reduction <add>, %23, %cst_13 [1] : vector<4x2xf32> to vector<4xf32>
    %25 = vector.shape_cast %24 : vector<4xf32> to vector<4x1xf32>
    %c0_14 = arith.constant 0 : index
    %c0_15 = arith.constant 0 : index
    %26 = vector.load %arg5[%c0_14, %c0_15] : memref<4x1xf32, #tpu.memory_space<vmem>>, vector<4x1xf32>
    %27 = arith.addf %25, %26 : vector<4x1xf32>
    %cst_16 = arith.constant 0.000000e+00 : f32
    %28 = vector.broadcast %cst_16 : f32 to vector<4x1xf32>
    %29 = arith.subf %28, %27 : vector<4x1xf32>
    %30 = math.exp %29 : vector<4x1xf32>
    %cst_17 = arith.constant 1.000000e+00 : f32
    %31 = vector.broadcast %cst_17 : f32 to vector<4x1xf32>
    %32 = arith.addf %31, %30 : vector<4x1xf32>
    %cst_18 = arith.constant 1.000000e+00 : f32
    %33 = vector.broadcast %cst_18 : f32 to vector<4x1xf32>
    %34 = arith.divf %33, %32 : vector<4x1xf32>
    %35 = vector.broadcast %34 : vector<4x1xf32> to vector<4x256xf32>
    %36 = arith.mulf %1, %35 : vector<4x256xf32>
    %c0_19 = arith.constant 0 : index
    %c0_20 = arith.constant 0 : index
    %c0_21 = arith.constant 0 : index
    %37 = vector.load %arg6[%c0_19, %c0_20, %c0_21] : memref<1x4x256xf32, #tpu.memory_space<vmem>>, vector<1x4x256xf32>
    %38 = vector.shape_cast %37 : vector<1x4x256xf32> to vector<4x256xf32>
    %39 = vector.shape_cast %36 : vector<4x256xf32> to vector<1x4x256xf32>
    tpu.vector_store %arg6[%c0_19, %c0_20, %c0_21], %39 {strides = array<i32>} : memref<1x4x256xf32, #tpu.memory_space<vmem>>, vector<1x4x256xf32>,
    return
  }
  func.func @transform_0(%arg0: i32) -> (i32, i32, i32) {
    %c0_i32 = arith.constant 0 : i32
    %c0_i32_0 = arith.constant 0 : i32
    %c0_i32_1 = arith.constant 0 : i32
    return %arg0, %c0_i32, %c0_i32_0 : i32, i32, i32
  }
  func.func @transform_1(%arg0: i32) -> (i32, i32) {
    %c0_i32 = arith.constant 0 : i32
    %c0_i32_0 = arith.constant 0 : i32
    %c0_i32_1 = arith.constant 0 : i32
    return %c0_i32, %c0_i32_0 : i32, i32
  }
  func.func @transform_2(%arg0: i32) -> (i32, i32) {
    %c0_i32 = arith.constant 0 : i32
    %c0_i32_0 = arith.constant 0 : i32
    %c0_i32_1 = arith.constant 0 : i32
    return %c0_i32, %c0_i32_0 : i32, i32
  }
  func.func @transform_3(%arg0: i32) -> (i32, i32) {
    %c0_i32 = arith.constant 0 : i32
    %c0_i32_0 = arith.constant 0 : i32
    %c0_i32_1 = arith.constant 0 : i32
    return %c0_i32, %c0_i32_0 : i32, i32
  }
  func.func @transform_4(%arg0: i32) -> (i32, i32) {
    %c0_i32 = arith.constant 0 : i32
    %c0_i32_0 = arith.constant 0 : i32
    %c0_i32_1 = arith.constant 0 : i32
    return %c0_i32, %c0_i32_0 : i32, i32
  }
  func.func @transform_5(%arg0: i32) -> (i32, i32, i32) {
    %c0_i32 = arith.constant 0 : i32
    %c0_i32_0 = arith.constant 0 : i32
    %c0_i32_1 = arith.constant 0 : i32
    return %arg0, %c0_i32, %c0_i32_0 : i32, i32, i32
  }
}

</mosaic_0001>

<llo_original>
// kernel: squeeze_excitation.1
$region0: #{squeeze_excitation.1}
  #allocation0 [shape = 'u32[]', space=smem, size = 0x4, offset = 0x4, fixed_abs, tag = 'smem constant byte address 0x4 - core index']
  #allocation1 [shape = 'u32[144,128]{1,0:T(1,128)}', space=vmem, size = 0x12000, scoped, tag = 'internal scratch']
  %s0 = inlined_call_operand.vmem [shape: f32[2,4,256], index: 0, kind: input, shape index: {}]
  %s1 = inlined_call_operand.vmem [shape: f32[4,2], index: 1, kind: input, shape index: {}]
  %s2 = inlined_call_operand.vmem [shape: f32[1,2], index: 2, kind: input, shape index: {}]
  %s3 = inlined_call_operand.vmem [shape: f32[4,2], index: 3, kind: input, shape index: {}]
  %s4 = inlined_call_operand.vmem [shape: f32[4,1], index: 4, kind: input, shape index: {}]
  %s5 = inlined_call_operand.vmem [shape: f32[2,4,256], index: 5, kind: output, shape index: {}]
  %s6 = sld [smem:[#allocation0]]
  $region53: #{squeeze_excitation.1} parent=0
    _
  %s8 = ssub.s32 1, %s6
  %s9 = scalar_select 0, %s8, %s6
  loop: start=0, step=1, limit=4
  $region2: #{squeeze_excitation.1} parent=0 // loop_pre_header
    _
  $region3: #{squeeze_excitation.1} parent=0 // loop_header
    %s11 = sphi 0, %s15
    %p12 = scmp.ge.s32.totalorder %s11, 4
    %s21 = sphi 0, %s23
    %s24 = sphi 0, %s21
    %s25 = sphi 0, %s24
    %s41 = sphi 0, %s25
    %s45 = sphi 0, %s45
    %s47 = sphi 0, %s45
    %s48 = sphi 0, %s47
    %s62 = sphi 0, %s48
    %s66 = sphi 0, %s66
    %s68 = sphi 0, %s66
    %s69 = sphi 0, %s68
    %s83 = sphi 0, %s69
    %s87 = sphi 0, %s87
    %s89 = sphi 0, %s87
    %s90 = sphi 0, %s89
    %s104 = sphi 0, %s90
    %s108 = sphi 0, %s108
    %s110 = sphi 0, %s108
    %s111 = sphi 0, %s110
    %s125 = sphi 0, %s111
    %s131 = sphi 0, %s133
    %s134 = sphi 0, %s131
    %s135 = sphi 0, %s134
    %s151 = sphi 0, %s135
  $region4: #{squeeze_excitation.1} parent=0 // loop_header_branch
    %14 = sbr.rel (%p12) target = $region8
  $region5: #{squeeze_excitation.1} parent=0 // loop_body
    %s16 = ssub.s32 %s11, 1
    %s17 = ssub.s32 %s11, 2
    %s18 = sadd.s32 %s11, 1
    %s19 = ssub.s32 %s11, %s18
    %p20 = scmp.eq.s32.totalorder %s19, 0
    %s22 = sadd.s32 %s21, 1
    %s23 = scalar_select %p20, %s21, %s22
    %p26 = pneg %p20
    %p27 = scmp.eq.s32.totalorder %s11, 1
    %p28 = por %p26, %p27
    %p29 = scmp.ne.s32.totalorder %s21, %s24
    %p30 = scmp.eq.s32.totalorder %s11, 0
    %p31 = por %p29, %p30
    %p32 = scmp.ne.s32.totalorder %s21, %s24
    %p33 = scmp.eq.s32.totalorder %s16, 1
    %p34 = por %p32, %p33
    %p35 = scmp.ne.s32.totalorder %s24, %s25
    %p36 = scmp.eq.s32.totalorder %s16, 0
    %p37 = por %p35, %p36
    %p38 = scmp.ne.s32.totalorder %s24, %s25
    %p39 = scmp.eq.s32.totalorder %s17, 1
    %p40 = por %p38, %p39
    %p42 = scmp.ne.s32.totalorder %s25, %s41
    %p43 = scmp.eq.s32.totalorder %s17, 0
    %p44 = por %p42, %p43
    %s46 = sadd.s32 %s45, 1
    %p49 = scmp.eq.s32.totalorder %s11, 1
    %p50 = scmp.ne.s32.totalorder %s45, %s47
    %p51 = scmp.eq.s32.totalorder %s11, 0
    %p52 = por %p50, %p51
    %p53 = scmp.ne.s32.totalorder %s45, %s47
    %p54 = scmp.eq.s32.totalorder %s16, 1
    %p55 = por %p53, %p54
    %p56 = scmp.ne.s32.totalorder %s47, %s48
    %p57 = scmp.eq.s32.totalorder %s16, 0
    %p58 = por %p56, %p57
    %p59 = scmp.ne.s32.totalorder %s47, %s48
    %p60 = scmp.eq.s32.totalorder %s17, 1
    %p61 = por %p59, %p60
    %p63 = scmp.ne.s32.totalorder %s48, %s62
    %p64 = scmp.eq.s32.totalorder %s17, 0
    %p65 = por %p63, %p64
    %s67 = sadd.s32 %s66, 1
    %p70 = scmp.eq.s32.totalorder %s11, 1
    %p71 = scmp.ne.s32.totalorder %s66, %s68
    %p72 = scmp.eq.s32.totalorder %s11, 0
    %p73 = por %p71, %p72
    %p74 = scmp.ne.s32.totalorder %s66, %s68
    %p75 = scmp.eq.s32.totalorder %s16, 1
    %p76 = por %p74, %p75
    %p77 = scmp.ne.s32.totalorder %s68, %s69
    %p78 = scmp.eq.s32.totalorder %s16, 0
    %p79 = por %p77, %p78
    %p80 = scmp.ne.s32.totalorder %s68, %s69
    %p81 = scmp.eq.s32.totalorder %s17, 1
    %p82 = por %p80, %p81
    %p84 = scmp.ne.s32.totalorder %s69, %s83
    %p85 = scmp.eq.s32.totalorder %s17, 0
    %p86 = por %p84, %p85
    %s88 = sadd.s32 %s87, 1
    %p91 = scmp.eq.s32.totalorder %s11, 1
    %p92 = scmp.ne.s32.totalorder %s87, %s89
    %p93 = scmp.eq.s32.totalorder %s11, 0
    %p94 = por %p92, %p93
    %p95 = scmp.ne.s32.totalorder %s87, %s89
    %p96 = scmp.eq.s32.totalorder %s16, 1
    %p97 = por %p95, %p96
    %p98 = scmp.ne.s32.totalorder %s89, %s90
    %p99 = scmp.eq.s32.totalorder %s16, 0
    %p100 = por %p98, %p99
    %p101 = scmp.ne.s32.totalorder %s89, %s90
    %p102 = scmp.eq.s32.totalorder %s17, 1
    %p103 = por %p101, %p102
    %p105 = scmp.ne.s32.totalorder %s90, %s104
    %p106 = scmp.eq.s32.totalorder %s17, 0
    %p107 = por %p105, %p106
    %s109 = sadd.s32 %s108, 1
    %p112 = scmp.eq.s32.totalorder %s11, 1
    %p113 = scmp.ne.s32.totalorder %s108, %s110
    %p114 = scmp.eq.s32.totalorder %s11, 0
    %p115 = por %p113, %p114
    %p116 = scmp.ne.s32.totalorder %s108, %s110
    %p117 = scmp.eq.s32.totalorder %s16, 1
    %p118 = por %p116, %p117
    %p119 = scmp.ne.s32.totalorder %s110, %s111
    %p120 = scmp.eq.s32.totalorder %s16, 0
    %p121 = por %p119, %p120
    %p122 = scmp.ne.s32.totalorder %s110, %s111
    %p123 = scmp.eq.s32.totalorder %s17, 1
    %p124 = por %p122, %p123
    %p126 = scmp.ne.s32.totalorder %s111, %s125
    %p127 = scmp.eq.s32.totalorder %s17, 0
    %p128 = por %p126, %p127
    %s129 = ssub.s32 %s11, %s18
    %p130 = scmp.eq.s32.totalorder %s129, 0
    %s132 = sadd.s32 %s131, 1
    %s133 = scalar_select %p130, %s131, %s132
    %p136 = pneg %p130
    %p137 = scmp.eq.s32.totalorder %s11, 1
    %p138 = por %p136, %p137
    %p139 = scmp.ne.s32.totalorder %s131, %s134
    %p140 = scmp.eq.s32.totalorder %s11, 0
    %p141 = por %p139, %p140
    %p142 = scmp.ne.s32.totalorder %s131, %s134
    %p143 = scmp.eq.s32.totalorder %s16, 1
    %p144 = por %p142, %p143
    %p145 = scmp.ne.s32.totalorder %s134, %s135
    %p146 = scmp.eq.s32.totalorder %s16, 0
    %p147 = por %p145, %p146
    %p148 = scmp.ne.s32.totalorder %s134, %s135
    %p149 = scmp.eq.s32.totalorder %s17, 1
    %p150 = por %p148, %p149
    %p152 = scmp.ne.s32.totalorder %s135, %s151
    %p153 = scmp.eq.s32.totalorder %s17, 0
    %p154 = por %p152, %p153
    %p155 = scmp.le.s32.totalorder 1, %s11
    %p156 = scmp.lt.s32.totalorder %s11, 3
    %p157 = pnand %p155, %p156
    %p158 = pneg %p157
    // Predicated region
    $region9: #{squeeze_excitation.1} parent=5 // pred_check
      _
    $region10: #{squeeze_excitation.1} parent=5 // pred_check_branch
      %160 = sbr.rel (%p157) target = $region12
    $region11: #{squeeze_excitation.1} parent=5 // pred_region
      %s161 = ssub.s32 %s11, 1
      // Predicated region
      $region13: #{squeeze_excitation.1} parent=11 // pred_check
        %p162 = pneg %p58
      $region14: #{squeeze_excitation.1} parent=11 // pred_check_branch
        %164 = sbr.rel (%p162) target = $region16
      $region15: #{squeeze_excitation.1} parent=11 // pred_region
        _
      $region16: #{squeeze_excitation.1} parent=11 // pred_fallthru
        _
      // Predicated region
      $region17: #{squeeze_excitation.1} parent=11 // pred_check
        %p165 = pneg %p79
      $region18: #{squeeze_excitation.1} parent=11 // pred_check_branch
        %167 = sbr.rel (%p165) target = $region20
      $region19: #{squeeze_excitation.1} parent=11 // pred_region
        _
      $region20: #{squeeze_excitation.1} parent=11 // pred_fallthru
        _
      // Predicated region
      $region21: #{squeeze_excitation.1} parent=11 // pred_check
        %p168 = pneg %p100
      $region22: #{squeeze_excitation.1} parent=11 // pred_check_branch
        %170 = sbr.rel (%p168) target = $region24
      $region23: #{squeeze_excitation.1} parent=11 // pred_region
        _
      $region24: #{squeeze_excitation.1} parent=11 // pred_fallthru
        _
      // Predicated region
      $region25: #{squeeze_excitation.1} parent=11 // pred_check
        %p171 = pneg %p121
      $region26: #{squeeze_excitation.1} parent=11 // pred_check_branch
        %173 = sbr.rel (%p171) target = $region28
      $region27: #{squeeze_excitation.1} parent=11 // pred_region
        _
      $region28: #{squeeze_excitation.1} parent=11 // pred_fallthru
        _
    $region12: #{squeeze_excitation.1} parent=5 // pred_fallthru
      _
    %p174 = scmp.lt.s32.totalorder %s11, 2
    // Predicated region
    $region29: #{squeeze_excitation.1} parent=5 // pred_check
      %p175 = pneg %p174
    $region30: #{squeeze_excitation.1} parent=5 // pred_check_branch
      %177 = sbr.rel (%p175) target = $region32
    $region31: #{squeeze_excitation.1} parent=5 // pred_region
      // Predicated region
      $region33: #{squeeze_excitation.1} parent=31 // pred_check
        %p178 = pneg %p31
      $region34: #{squeeze_excitation.1} parent=31 // pred_check_branch
        %180 = sbr.rel (%p178) target = $region36
      $region35: #{squeeze_excitation.1} parent=31 // pred_region
        %p181 = scmp.lt.s32.totalorder %s11, 1
        %s182 = scalar_select %p181, %s11, 1
        %s183 = smul.addr %s182, 2
        %s184 = smul.addr %s183, 4
        %s185 = scalar_lea.vmem %s0, %s184
      $region36: #{squeeze_excitation.1} parent=31 // pred_fallthru
        _
    $region32: #{squeeze_excitation.1} parent=5 // pred_fallthru
      _
    %p186 = scmp.le.s32.totalorder 1, %s11
    %p187 = scmp.lt.s32.totalorder %s11, 3
    %p188 = pnand %p186, %p187
    %p189 = pneg %p188
    // Predicated region
    $region37: #{squeeze_excitation.1} parent=5 // pred_check
      _
    $region38: #{squeeze_excitation.1} parent=5 // pred_check_branch
      %191 = sbr.rel (%p188) target = $region40
    $region39: #{squeeze_excitation.1} parent=5 // pred_region
      %s192 = ssub.s32 %s11, 1
      %p193 = scmp.lt.s32.totalorder %s16, 1
      %s194 = scalar_select %p193, %s16, 1
      %s195 = smul.addr %s194, 2
      %s196 = smul.addr %s195, 4
      %s197 = scalar_lea.vmem %s0, %s196
      %p198 = pneg %p37
      %p199 = pneg %p34
      %p200 = pneg %p58
      %p201 = pneg %p55
      %p202 = pneg %p79
      %p203 = pneg %p76
      %p204 = pneg %p100
      %p205 = pneg %p97
      %p206 = pneg %p121
      %p207 = pneg %p118
      %p208 = pneg %p147
      %p209 = pneg %p144
      %p210 = scmp.lt.s32.totalorder %s16, 1
      %s211 = scalar_select %p210, %s16, 1
      %s212 = smul.addr %s211, 2
      %s213 = smul.addr %s212, 4
      %s214 = scalar_lea.vmem %s5, %s213
      %p215 = scmp.lt.s32.totalorder %s16, 1
      %s216 = scalar_select %p215, %s16, 1
      %s217 = smul.addr %s216, 2
      %s218 = smul.addr %s217, 4
      %s219 = scalar_lea.vmem %s0, %s218
      %p220 = scmp.lt.s32.totalorder %s16, 1
      %s221 = scalar_select %p220, %s16, 1
      %s222 = smul.addr %s221, 2
      %s223 = smul.addr %s222, 4
      %s224 = scalar_lea.vmem %s5, %s223
      %v225 = vld [vmem:[%s219] sm:$0xff]
      %v227 = vcombine.high %v225, %v225
      %vm229 = vcmask 1043456
      %v230 = vsel %vm229, %v225, 0.0
      %v231 = vsel %vm229, %v227, 0.0
      %v232 = vadd.f32 %v230, %v231
      %233 = vadd.xlane.f32.xlu0 %v232
      %v234 = vpop.xlane.xlu0 %233
      %v235 = vmul.f32 %v234, 0.00390625
      %v236 = vld [vmem:[%s1] sm:$0xf]
      %v237 = vmul.f32 %v236, %v235
      %vm238 = vcmask 11264
      %v239 = vsel %vm238, %v237, 0.0
      %v240 = vrot.slane %v239, 4
      %v241 = vadd.f32 %v239, %v240
      %v242 = vrot.slane %v241, 2
      %v243 = vadd.f32 %v241, %v242
      %v244 = vrot.slane %v243, 1
      %v245 = vadd.f32 %v243, %v244
      %v246 = vld [vmem:[%s2] sm:$0x1]
      %v247 = vadd.f32 %v245, %v246
      %v248 = vsub.f32 0.0, %v247
      %v249 = vmul.f32 %v248, 1.442695
      %v250 = vpow.pop %v249
      %v251 = vadd.f32 %v250, 1.0
      %v252 = vrcp.pop %v251
      %v253 = vmul.f32 1.0, %v252
      %v254 = vmul.f32 %v247, %v253
      %v255 = vld [vmem:[%s3] sm:$0xf]
      %v256 = vlaneseq
      %v257 = vshrl.u32 %v256, 7
      %v258 = vsub.s32 0, %v257
      %v259 = vrot.slane %v254, %v258
      %v260 = vmul.f32 %v255, %v259
      %v261 = vsel %vm238, %v260, 0.0
      %262 = vadd.xlane.f32.xlu0 %v261
      %v263 = vpop.xlane.xlu0 %262
      %v264 = vld [vmem:[%s4] sm:$0xf]
      %v265 = vadd.f32 %v263, %v264
      %v266 = vsub.f32 0.0, %v265
      %v267 = vmul.f32 %v266, 1.442695
      %v268 = vpow.pop %v267
      %v269 = vadd.f32 %v268, 1.0
      %v270 = vrcp.pop %v269
      %v271 = vmul.f32 1.0, %v270
      %273 = vset.pattern.permute.xlu0 0
      %274 = vperm.xlu0 %273, %v271
      %v275 = vpop.permute.xlu0 %274
      %v277 = vunpack.c.l.s4 839922192
      %v278 = vunpack.c.0.s8 %v277
      %v279 = vlaneseq
      %v280 = vshrl.u32 %v279, 7
      %v281 = vsub.s32 %v278, %v280
      %v282 = vrot.slane %v275, %v281
      %v284 = vmul.f32 %v225, %v282
      %285 = vst [vmem:[%s224] sm:$0xff] %v284
      %p286 = scmp.lt.s32.totalorder %s16, 1
      %s287 = scalar_select %p286, %s16, 1
      %s288 = smul.addr %s287, 2
      %s289 = smul.addr %s288, 4
      %s290 = scalar_lea.vmem %s5, %s289
      // Predicated region
      $region41: #{squeeze_excitation.1} parent=39 // pred_check
        %p291 = pneg %p144
      $region42: #{squeeze_excitation.1} parent=39 // pred_check_branch
        %293 = sbr.rel (%p291) target = $region44
      $region43: #{squeeze_excitation.1} parent=39 // pred_region
        _
      $region44: #{squeeze_excitation.1} parent=39 // pred_fallthru
        _
    $region40: #{squeeze_excitation.1} parent=5 // pred_fallthru
      _
    %p294 = scmp.le.s32.totalorder 2, %s11
    // Predicated region
    $region45: #{squeeze_excitation.1} parent=5 // pred_check
      %p295 = pneg %p294
    $region46: #{squeeze_excitation.1} parent=5 // pred_check_branch
      %297 = sbr.rel (%p295) target = $region48
    $region47: #{squeeze_excitation.1} parent=5 // pred_region
      %s298 = ssub.s32 %s11, 2
      // Predicated region
      $region49: #{squeeze_excitation.1} parent=47 // pred_check
        %p299 = pneg %p150
      $region50: #{squeeze_excitation.1} parent=47 // pred_check_branch
        %301 = sbr.rel (%p299) target = $region52
      $region51: #{squeeze_excitation.1} parent=47 // pred_region
        %p302 = scmp.lt.s32.totalorder %s17, 1
        %s303 = scalar_select %p302, %s17, 1
        %s304 = smul.addr %s303, 2
        %s305 = smul.addr %s304, 4
        %s306 = scalar_lea.vmem %s5, %s305
      $region52: #{squeeze_excitation.1} parent=47 // pred_fallthru
        _
    $region48: #{squeeze_excitation.1} parent=5 // pred_fallthru
      _
  $region6: #{squeeze_excitation.1} parent=0 // loop_footer
    %s15 = sadd.s32 1, %s11
  $region7: #{squeeze_excitation.1} parent=0 // loop_footer_branch
    %10 = sbr.rel target = $region3
  $region8: #{squeeze_excitation.1} parent=0 // loop_exit
    _

</llo_original>
